<compile_context>
chip_gen: v7x
topology: tpu7x:2x2x1
jax: 0.10.0
libtpu: 0.0.40
codegen_flags: <defaults>
</compile_context>

<pallas_src>
import functools

import numpy as np
import jax
import jax.numpy as jnp
from jax.experimental import pallas as pl
from jax.experimental.pallas import tpu as pltpu


# ----------------------------------------------------------------------------
# Cell-anchor generation (pure numpy "parameter setup", identical math to the
# PyTorch reference, deterministic — no checkpoint load needed).
# ----------------------------------------------------------------------------
def _mkanchors(ws, hs, x_ctr, y_ctr):
    ws = ws[:, np.newaxis]
    hs = hs[:, np.newaxis]
    return np.hstack((x_ctr - 0.5 * (ws - 1),
                      y_ctr - 0.5 * (hs - 1),
                      x_ctr + 0.5 * (ws - 1),
                      y_ctr + 0.5 * (hs - 1)))


def _whctrs(anchor):
    w = anchor[2] - anchor[0] + 1
    h = anchor[3] - anchor[1] + 1
    x_ctr = anchor[0] + 0.5 * (w - 1)
    y_ctr = anchor[1] + 0.5 * (h - 1)
    return w, h, x_ctr, y_ctr


def _ratio_enum(anchor, ratios):
    w, h, x_ctr, y_ctr = _whctrs(anchor)
    size = w * h
    size_ratios = size / ratios
    ws = np.round(np.sqrt(size_ratios))
    hs = np.round(ws * ratios)
    return _mkanchors(ws, hs, x_ctr, y_ctr)


def _scale_enum(anchor, scales):
    w, h, x_ctr, y_ctr = _whctrs(anchor)
    ws = w * scales
    hs = h * scales
    return _mkanchors(ws, hs, x_ctr, y_ctr)


def _generate_anchors(base_size, scales, aspect_ratios):
    anchor = np.array([1, 1, base_size, base_size], dtype=np.float64) - 1
    anchors = _ratio_enum(anchor, aspect_ratios)
    anchors = np.vstack(
        [_scale_enum(anchors[i, :], scales) for i in range(anchors.shape[0])])
    return anchors


def generate_anchors(stride=16, sizes=(32, 64, 128, 256, 512),
                     aspect_ratios=(0.5, 1, 2)):
    return _generate_anchors(stride,
                             np.array(sizes, dtype=np.float64) / stride,
                             np.array(aspect_ratios, dtype=np.float64))


# ----------------------------------------------------------------------------
# Pallas kernel: one FPN level, grid over lane-dense spatial blocks.
#   cell_ref : VMEM (4A, 1)  f32, row c*A + a = cell anchor coord c of anchor a
#   isx_ref  : VMEM (4A, 1)  f32, 1.0 for x-coordinate rows, 0.0 for y rows
#   wb_ref   : VMEM (N*A, 1) f32, row n*A + a = image_w[n] + straddle_thresh
#   hb_ref   : VMEM (N*A, 1) f32, row n*A + a = image_h[n] + straddle_thresh
#   anchors_ref: VMEM (4A, block_hw)  f32 output block
#   vis_ref    : VMEM (N*A, block_hw) int8 output block
# ----------------------------------------------------------------------------
def _fpn_level_kernel(cell_ref, isx_ref, wb_ref, hb_ref, anchors_ref, vis_ref,
                      *, stride, straddle_thresh, A, W, n_img, block_hw):
    f32 = jnp.float32
    j = pl.program_id(0)
    base = j * block_hw

    # Global flattened spatial index for every lane of this block.
    p_i = base + jax.lax.broadcasted_iota(jnp.int32, (1, block_hw), 1)
    # y = p // W, x = p % W via f32 divide + exact +/-1 integer correction.
    # Exact for HW < 2**23 (all realistic FPN levels).
    y_i = (p_i.astype(f32) / f32(W)).astype(jnp.int32)
    x_i = p_i - y_i * W
    y_i = y_i - (x_i < 0).astype(jnp.int32) + (x_i >= W).astype(jnp.int32)
    x_i = p_i - y_i * W
    xs = x_i.astype(f32) * f32(stride)          # (1, block_hw)
    ys = y_i.astype(f32) * f32(stride)          # (1, block_hw)

    # Anchor planes, coordinate-major rows (r = c*A + a): one vectorized pass.
    shift = jnp.where(isx_ref[...] > f32(0.5), xs, ys)   # (4A, block_hw)
    slab = cell_ref[...] + shift                         # (4A, block_hw)
    anchors_ref[...] = slab

    if straddle_thresh >= 0:
        t = f32(straddle_thresh)
        x1 = slab[0 * A:1 * A, :]
        y1 = slab[1 * A:2 * A, :]
        x2 = slab[2 * A:3 * A, :]
        y2 = slab[3 * A:4 * A, :]
        # Vectorize across images: tile the (A, L) planes to (N*A, L) and
        # compare against per-row bound columns.  Whole-slab VPU ops, one
        # direct bool -> int8 cast for the store.
        x1r = jnp.tile(x1, (n_img, 1))
        y1r = jnp.tile(y1, (n_img, 1))
        x2r = jnp.tile(x2, (n_img, 1))
        y2r = jnp.tile(y2, (n_img, 1))
        vis = ((x1r >= -t) & (y1r >= -t)
               & (x2r < wb_ref[...]) & (y2r < hb_ref[...]))
        vis_ref[...] = vis.astype(jnp.int8)
    else:
        vis_ref[...] = jnp.ones((n_img * A, block_hw), dtype=jnp.int8)


# ----------------------------------------------------------------------------
# Per-level wrapper: single pallas_call (grid over spatial blocks) + fused
# layout ops (slice off lane padding, transpose to the PyTorch ordering).
# ----------------------------------------------------------------------------
_LANE = 128
_MAX_BLOCK_HW = 16384      # 128x128 lanes per spatial tile (VMEM-safe on v5e/v7x)


def _round_up(x, m):
    return (x + m - 1) // m * m


@functools.partial(jax.jit,
                   static_argnames=("H", "W", "stride", "straddle_thresh", "A"))
def _anchor_level(cell_col, isx_col, wb, hb, *, H, W, stride, straddle_thresh, A):
    """cell_col/isx_col: (4A,1) f32; wb/hb: (N*A,1) f32 per-row bounds."""
    HW = H * W
    n_img = wb.shape[0] // A

    if HW <= _MAX_BLOCK_HW:
        hw_pad = _round_up(max(HW, _LANE), _LANE)
        block_hw = hw_pad
    else:
        block_hw = _MAX_BLOCK_HW
        hw_pad = _round_up(HW, block_hw)
    n_blocks = hw_pad // block_hw

    kernel = functools.partial(
        _fpn_level_kernel, stride=stride, straddle_thresh=straddle_thresh,
        A=A, W=W, n_img=n_img, block_hw=block_hw)

    anchors_raw, vis_raw = pl.pallas_call(
        kernel,
        out_shape=(jax.ShapeDtypeStruct((4 * A, hw_pad), jnp.float32),
                   jax.ShapeDtypeStruct((n_img * A, hw_pad), jnp.int8)),
        grid=(n_blocks,),
        in_specs=[
            pl.BlockSpec((4 * A, 1), lambda j: (0, 0)),        # cell_col
            pl.BlockSpec((4 * A, 1), lambda j: (0, 0)),        # isx_col
            pl.BlockSpec((n_img * A, 1), lambda j: (0, 0)),    # wb
            pl.BlockSpec((n_img * A, 1), lambda j: (0, 0)),    # hb
        ],
        out_specs=(
            pl.BlockSpec((4 * A, block_hw), lambda j: (0, j)),
            pl.BlockSpec((n_img * A, block_hw), lambda j: (0, j)),
        ),
        compiler_params=pltpu.CompilerParams(
            # no carried state -> spatial axis is truly parallel (v7x megacore)
            dimension_semantics=("parallel",)),
    )(cell_col, isx_col, wb, hb)

    # (4A, HW) rows r=c*A+a  ->  (HW*A, 4) PyTorch order (p-major, anchor, coord)
    anchors = jnp.transpose(anchors_raw[:, :HW], (1, 0))      # (HW, 4A)
    anchors = anchors.reshape(HW, 4, A)                       # [p, c, a]
    anchors = jnp.transpose(anchors, (0, 2, 1)).reshape(HW * A, 4)

    # (N*A, HW) rows r=n*A+a  ->  (N, HW*A) uint8
    vis = vis_raw[:, :HW].reshape(n_img, A, HW)
    vis = jnp.transpose(vis, (0, 2, 1)).reshape(n_img, HW * A).astype(jnp.uint8)
    return anchors, vis


# ----------------------------------------------------------------------------
# Module wrapper (parameter setup + per-level loop is glue).
# ----------------------------------------------------------------------------
class FPNAnchorGeneratorPallas:
    def __init__(self, scales=(0.5, 1.0, 2.0), aspect_ratios=(0.5, 1.0, 2.0),
                 base_anchor_size=256, anchor_strides=(8, 16, 32),
                 straddle_thresh=0):
        sizes = tuple(i * base_anchor_size for i in scales)
        self.cell_anchors = [
            np.asarray(generate_anchors(stride, (size,), aspect_ratios),
                       dtype=np.float32)
            for stride, size in zip(anchor_strides, sizes)
        ]
        self.strides = anchor_strides
        self.straddle_thresh = straddle_thresh

    def num_anchors_per_location(self):
        return [int(c.shape[0]) for c in self.cell_anchors]

    @staticmethod
    def _level_inputs(cell_np, image_sizes, straddle_thresh):
        A = int(cell_np.shape[0])
        n_img = len(image_sizes)
        # row r = c*A + a  (coordinate-major)
        cell_col = jnp.asarray(cell_np.T.reshape(4 * A, 1), dtype=jnp.float32)
        isx = np.zeros((4 * A, 1), dtype=np.float32)
        isx[0 * A:1 * A] = 1.0   # x1 rows
        isx[2 * A:3 * A] = 1.0   # x2 rows
        isx_col = jnp.asarray(isx)
        t = float(straddle_thresh) if straddle_thresh >= 0 else 0.0
        heights = np.array([h for (h, w) in image_sizes], dtype=np.float32)
        widths = np.array([w for (h, w) in image_sizes], dtype=np.float32)
        wb = jnp.asarray((np.repeat(widths, A) + t).reshape(n_img * A, 1))
        hb = jnp.asarray((np.repeat(heights, A) + t).reshape(n_img * A, 1))
        return A, cell_col, isx_col, wb, hb

    def forward(self, image_sizes, feature_maps):
        # image_sizes: list of (h, w); feature_maps: list(levels) of list(images)
        all_anchors = []
        for fmap_level, stride, cell_np in zip(feature_maps, self.strides,
                                               self.cell_anchors):
            A, cell_col, isx_col, wb, hb = self._level_inputs(
                cell_np, image_sizes, self.straddle_thresh)
            shapes = [(int(f.shape[-2]), int(f.shape[-1])) for f in fmap_level]
            per_level = [None] * len(fmap_level)
            if len(set(shapes)) == 1:
                # Common case: same feature size for every image -> one call.
                H, W = shapes[0]
                boxes, vis = _anchor_level(
                    cell_col, isx_col, wb, hb, H=H, W=W, stride=int(stride),
                    straddle_thresh=float(self.straddle_thresh), A=A)
                for n, (h, w) in enumerate(image_sizes):
                    per_level[n] = {"anchors": boxes,          # (H*W*A, 4) xyxy
                                    "visibility": vis[n],      # (H*W*A,) uint8
                                    "size": (w, h),            # (w, h) like BoxList
                                    "mode": "xyxy"}
            else:
                # Fallback: differing per-image feature sizes at this level.
                for n, ((h, w), (H, W)) in enumerate(zip(image_sizes, shapes)):
                    boxes, vis = _anchor_level(
                        cell_col, isx_col,
                        wb[n * A:(n + 1) * A], hb[n * A:(n + 1) * A],
                        H=H, W=W, stride=int(stride),
                        straddle_thresh=float(self.straddle_thresh), A=A)
                    per_level[n] = {"anchors": boxes, "visibility": vis[0],
                                    "size": (w, h), "mode": "xyxy"}
            all_anchors.append(per_level)
        return all_anchors
        # TODO(synk): BoxList container / add_field bookkeeping from
        # maskrcnn_benchmark has no Pallas equivalent; plain dicts returned.


# ----------------------------------------------------------------------------
# Pure-numpy reference for validation.
# ----------------------------------------------------------------------------
def _reference_single(cell, img_hw, grid_hw, stride, straddle_thresh):
    cell = np.asarray(cell, dtype=np.float32)
    H, W = grid_hw
    shift_x = np.arange(0, W, dtype=np.float32) * stride
    shift_y = np.arange(0, H, dtype=np.float32) * stride
    sx, sy = np.meshgrid(shift_x, shift_y)  # (H, W), y-outer / x-inner
    shifts = np.stack((sx.ravel(), sy.ravel(), sx.ravel(), sy.ravel()), axis=1)
    anchors = (shifts[:, None, :] + cell[None, :, :]).reshape(-1, 4)
    img_h, img_w = img_hw
    if straddle_thresh >= 0:
        vis = ((anchors[:, 0] >= -straddle_thresh)
               & (anchors[:, 1] >= -straddle_thresh)
               & (anchors[:, 2] < img_w + straddle_thresh)
               & (anchors[:, 3] < img_h + straddle_thresh)).astype(np.uint8)
    else:
        vis = np.ones(anchors.shape[0], dtype=np.uint8)
    return anchors, vis


if __name__ == "__main__":
    key = jax.random.PRNGKey(0)

    # Small synthetic inputs: 2 images, 3 FPN levels (strides 8/16/32).
    image_sizes = [(120, 128), (128, 112)]  # (h, w)
    level_spatial = [(16, 16), (8, 8), (4, 4)]
    C = 4
    feature_maps = []
    for (h, w) in level_spatial:
        level = []
        for _ in range(len(image_sizes)):
            key, sub = jax.random.split(key)
            level.append(jax.random.normal(sub, (C, h, w), dtype=jnp.float32))
        feature_maps.append(level)

    gen = FPNAnchorGeneratorPallas()
    out = gen.forward(image_sizes, feature_maps)

    # Block on all results and validate against the numpy reference.
    ok = True
    for lvl, (stride, cell) in enumerate(zip(gen.strides, gen.cell_anchors)):
        for img_idx, img_size in enumerate(image_sizes):
            res = out[lvl][img_idx]
            anchors = np.asarray(jax.block_until_ready(res["anchors"]))
            vis = np.asarray(jax.block_until_ready(res["visibility"]))
            H, W = level_spatial[lvl]
            ref_a, ref_v = _reference_single(np.asarray(cell), img_size, (H, W),
                                             stride, gen.straddle_thresh)
            ok &= np.allclose(anchors, ref_a, atol=1e-4)
            ok &= np.array_equal(vis, ref_v)

    if ok:
        print("KERNEL_OK")
    else:
        print("MISMATCH")
</pallas_src>

<mosaic_0001>
module attributes {stable_mosaic.version = 11 : i64} {
  func.func @_fpn_level_kernel(%arg0: i32, %arg1: memref<12x1xf32, #tpu.memory_space<vmem>>, %arg2: memref<12x1xf32, #tpu.memory_space<vmem>>, %arg3: memref<6x1xf32, #tpu.memory_space<vmem>>, %arg4: memref<6x1xf32, #tpu.memory_space<vmem>>, %arg5: memref<12x256xf32, #tpu.memory_space<vmem>>, %arg6: memref<6x256xi8, #tpu.memory_space<vmem>>) attributes {dimension_semantics = [#tpu.dimension_semantics<parallel>], iteration_bounds = array<i64: 1>, scalar_prefetch = 0 : i64, scratch_operands = 0 : i64, tpu.core_type = #tpu.core_type<tc>, window_params = [{pipeline_mode = #tpu.pipeline_mode<synchronous>, transform_indices = @transform_0, window_bounds = array<i64: 12, 1>}, {pipeline_mode = #tpu.pipeline_mode<synchronous>, transform_indices = @transform_1, window_bounds = array<i64: 12, 1>}, {pipeline_mode = #tpu.pipeline_mode<synchronous>, transform_indices = @transform_2, window_bounds = array<i64: 6, 1>}, {pipeline_mode = #tpu.pipeline_mode<synchronous>, transform_indices = @transform_3, window_bounds = array<i64: 6, 1>}, {transform_indices = @transform_4, window_bounds = array<i64: 12, 256>}, {transform_indices = @transform_5, window_bounds = array<i64: 6, 256>}]} {
    %c256_i32 = arith.constant 256 : i32
    %0 = arith.muli %arg0, %c256_i32 : i32
    %1 = tpu.iota {dimensions = array<i32: 1>} : vector<1x256xi32>
    %2 = vector.broadcast %0 : i32 to vector<1x256xi32>
    %3 = arith.addi %2, %1 : vector<1x256xi32>
    %4 = arith.sitofp %3 : vector<1x256xi32> to vector<1x256xf32>
    %cst = arith.constant 1.600000e+01 : f32
    %5 = vector.broadcast %cst : f32 to vector<1x256xf32>
    %6 = arith.divf %4, %5 : vector<1x256xf32>
    %7 = arith.fptosi %6 : vector<1x256xf32> to vector<1x256xi32>
    %c16_i32 = arith.constant 16 : i32
    %8 = vector.broadcast %c16_i32 : i32 to vector<1x256xi32>
    %9 = arith.muli %7, %8 : vector<1x256xi32>
    %10 = arith.subi %3, %9 : vector<1x256xi32>
    %c0_i32 = arith.constant 0 : i32
    %11 = vector.broadcast %c0_i32 : i32 to vector<1x256xi32>
    %12 = arith.cmpi slt, %10, %11 : vector<1x256xi32>
    %13 = arith.extui %12 : vector<1x256xi1> to vector<1x256xi32>
    %14 = arith.subi %7, %13 : vector<1x256xi32>
    %c16_i32_0 = arith.constant 16 : i32
    %15 = vector.broadcast %c16_i32_0 : i32 to vector<1x256xi32>
    %16 = arith.cmpi sge, %10, %15 : vector<1x256xi32>
    %17 = arith.extui %16 : vector<1x256xi1> to vector<1x256xi32>
    %18 = arith.addi %14, %17 : vector<1x256xi32>
    %c16_i32_1 = arith.constant 16 : i32
    %19 = vector.broadcast %c16_i32_1 : i32 to vector<1x256xi32>
    %20 = arith.muli %18, %19 : vector<1x256xi32>
    %21 = arith.subi %3, %20 : vector<1x256xi32>
    %22 = arith.sitofp %21 : vector<1x256xi32> to vector<1x256xf32>
    %cst_2 = arith.constant 8.000000e+00 : f32
    %23 = vector.broadcast %cst_2 : f32 to vector<1x256xf32>
    %24 = arith.mulf %22, %23 : vector<1x256xf32>
    %25 = arith.sitofp %18 : vector<1x256xi32> to vector<1x256xf32>
    %cst_3 = arith.constant 8.000000e+00 : f32
    %26 = vector.broadcast %cst_3 : f32 to vector<1x256xf32>
    %27 = arith.mulf %25, %26 : vector<1x256xf32>
    %c0 = arith.constant 0 : index
    %c0_4 = arith.constant 0 : index
    %28 = vector.load %arg2[%c0, %c0_4] : memref<12x1xf32, #tpu.memory_space<vmem>>, vector<12x1xf32>
    %cst_5 = arith.constant 5.000000e-01 : f32
    %29 = vector.broadcast %cst_5 : f32 to vector<12x1xf32>
    %30 = arith.cmpf ogt, %28, %29 : vector<12x1xf32>
    %31 = vector.shape_cast %30 : vector<12x1xi1> to vector<12x1xi1>
    %32 = vector.broadcast %31 : vector<12x1xi1> to vector<12x256xi1>
    %33 = vector.shape_cast %24 : vector<1x256xf32> to vector<1x256xf32>
    %34 = vector.broadcast %33 : vector<1x256xf32> to vector<12x256xf32>
    %35 = vector.shape_cast %27 : vector<1x256xf32> to vector<1x256xf32>
    %36 = vector.broadcast %35 : vector<1x256xf32> to vector<12x256xf32>
    %37 = arith.select %32, %34, %36 : vector<12x256xi1>, vector<12x256xf32>
    %c0_6 = arith.constant 0 : index
    %c0_7 = arith.constant 0 : index
    %38 = vector.load %arg1[%c0_6, %c0_7] : memref<12x1xf32, #tpu.memory_space<vmem>>, vector<12x1xf32>
    %39 = vector.broadcast %38 : vector<12x1xf32> to vector<12x256xf32>
    %40 = arith.addf %39, %37 : vector<12x256xf32>
    %c0_8 = arith.constant 0 : index
    %c0_9 = arith.constant 0 : index
    %41 = vector.load %arg5[%c0_8, %c0_9] : memref<12x256xf32, #tpu.memory_space<vmem>>, vector<12x256xf32>
    tpu.vector_store %arg5[%c0_8, %c0_9], %40 {strides = array<i32>} : memref<12x256xf32, #tpu.memory_space<vmem>>, vector<12x256xf32>,
    %42 = vector.extract_strided_slice %40 {offsets = [0, 0], sizes = [3, 256], strides = [1, 1]} : vector<12x256xf32> to vector<3x256xf32>
    %43 = vector.extract_strided_slice %40 {offsets = [3, 0], sizes = [3, 256], strides = [1, 1]} : vector<12x256xf32> to vector<3x256xf32>
    %44 = vector.extract_strided_slice %40 {offsets = [6, 0], sizes = [3, 256], strides = [1, 1]} : vector<12x256xf32> to vector<3x256xf32>
    %45 = vector.extract_strided_slice %40 {offsets = [9, 0], sizes = [3, 256], strides = [1, 1]} : vector<12x256xf32> to vector<3x256xf32>
    %46 = tpu.concatenate %42, %42 in 0 : vector<3x256xf32>, vector<3x256xf32> -> vector<6x256xf32>
    %47 = tpu.concatenate %43, %43 in 0 : vector<3x256xf32>, vector<3x256xf32> -> vector<6x256xf32>
    %48 = tpu.concatenate %44, %44 in 0 : vector<3x256xf32>, vector<3x256xf32> -> vector<6x256xf32>
    %49 = tpu.concatenate %45, %45 in 0 : vector<3x256xf32>, vector<3x256xf32> -> vector<6x256xf32>
    %cst_10 = arith.constant 0.000000e+00 : f32
    %cst_11 = arith.constant 0.000000e+00 : f32
    %50 = arith.subf %cst_10, %cst_11 : f32
    %51 = vector.broadcast %50 : f32 to vector<6x256xf32>
    %52 = arith.cmpf oge, %46, %51 : vector<6x256xf32>
    %cst_12 = arith.constant 0.000000e+00 : f32
    %cst_13 = arith.constant 0.000000e+00 : f32
    %53 = arith.subf %cst_12, %cst_13 : f32
    %54 = vector.broadcast %53 : f32 to vector<6x256xf32>
    %55 = arith.cmpf oge, %47, %54 : vector<6x256xf32>
    %56 = arith.andi %52, %55 : vector<6x256xi1>
    %c0_14 = arith.constant 0 : index
    %c0_15 = arith.constant 0 : index
    %57 = vector.load %arg3[%c0_14, %c0_15] : memref<6x1xf32, #tpu.memory_space<vmem>>, vector<6x1xf32>
    %58 = vector.broadcast %57 : vector<6x1xf32> to vector<6x256xf32>
    %59 = arith.cmpf olt, %48, %58 : vector<6x256xf32>
    %60 = arith.andi %56, %59 : vector<6x256xi1>
    %c0_16 = arith.constant 0 : index
    %c0_17 = arith.constant 0 : index
    %61 = vector.load %arg4[%c0_16, %c0_17] : memref<6x1xf32, #tpu.memory_space<vmem>>, vector<6x1xf32>
    %62 = vector.broadcast %61 : vector<6x1xf32> to vector<6x256xf32>
    %63 = arith.cmpf olt, %49, %62 : vector<6x256xf32>
    %64 = arith.andi %60, %63 : vector<6x256xi1>
    %65 = arith.extui %64 : vector<6x256xi1> to vector<6x256xi8>
    %c0_18 = arith.constant 0 : index
    %c0_19 = arith.constant 0 : index
    %66 = vector.load %arg6[%c0_18, %c0_19] : memref<6x256xi8, #tpu.memory_space<vmem>>, vector<6x256xi8>
    tpu.vector_store %arg6[%c0_18, %c0_19], %65 {strides = array<i32>} : memref<6x256xi8, #tpu.memory_space<vmem>>, vector<6x256xi8>,
    return
  }
  func.func @transform_0(%arg0: i32) -> (i32, i32) {
    %c0_i32 = arith.constant 0 : i32
    %c0_i32_0 = arith.constant 0 : i32
    %c0_i32_1 = arith.constant 0 : i32
    return %c0_i32, %c0_i32_0 : i32, i32
  }
  func.func @transform_1(%arg0: i32) -> (i32, i32) {
    %c0_i32 = arith.constant 0 : i32
    %c0_i32_0 = arith.constant 0 : i32
    %c0_i32_1 = arith.constant 0 : i32
    return %c0_i32, %c0_i32_0 : i32, i32
  }
  func.func @transform_2(%arg0: i32) -> (i32, i32) {
    %c0_i32 = arith.constant 0 : i32
    %c0_i32_0 = arith.constant 0 : i32
    %c0_i32_1 = arith.constant 0 : i32
    return %c0_i32, %c0_i32_0 : i32, i32
  }
  func.func @transform_3(%arg0: i32) -> (i32, i32) {
    %c0_i32 = arith.constant 0 : i32
    %c0_i32_0 = arith.constant 0 : i32
    %c0_i32_1 = arith.constant 0 : i32
    return %c0_i32, %c0_i32_0 : i32, i32
  }
  func.func @transform_4(%arg0: i32) -> (i32, i32) {
    %c0_i32 = arith.constant 0 : i32
    %c0_i32_0 = arith.constant 0 : i32
    return %c0_i32, %arg0 : i32, i32
  }
  func.func @transform_5(%arg0: i32) -> (i32, i32) {
    %c0_i32 = arith.constant 0 : i32
    %c0_i32_0 = arith.constant 0 : i32
    return %c0_i32, %arg0 : i32, i32
  }
}

</mosaic_0001>

<llo_original>
// kernel: _anchor_level.1
$region0: #{_anchor_level.1}
  #allocation0 [shape = 'u32[]', space=smem, size = 0x4, offset = 0x4, fixed_abs, tag = 'smem constant byte address 0x4 - core index']
  #allocation1 [shape = 'u32[144,128]{1,0:T(1,128)}', space=vmem, size = 0x12000, scoped, tag = 'internal scratch']
  %s0 = inlined_call_operand.vmem [shape: f32[12,1], index: 0, kind: input, shape index: {}]
  %s1 = inlined_call_operand.vmem [shape: f32[12,1], index: 1, kind: input, shape index: {}]
  %s2 = inlined_call_operand.vmem [shape: f32[6,1], index: 2, kind: input, shape index: {}]
  %s3 = inlined_call_operand.vmem [shape: f32[6,1], index: 3, kind: input, shape index: {}]
  %s4 = inlined_call_operand.vmem [shape: f32[12,256], index: 4, kind: output, shape index: {0}]
  %s5 = inlined_call_operand.vmem [shape: s8[6,256], index: 5, kind: output, shape index: {1}]
  %6 = xla_tuple %s4, %s5
  %s7 = sld [smem:[#allocation0]]
  $region34: #{_anchor_level.1} parent=0
    _
  %s9 = ssub.s32 1, %s7
  %s10 = scalar_select 0, %s9, %s7
  // Predicated region
  $region2: #{_anchor_level.1} parent=0 // pred_check
    _
  $region3: #{_anchor_level.1} parent=0 // pred_check_branch
    %12 = sbr.rel (0) target = $region5
  $region4: #{_anchor_level.1} parent=0 // pred_region
    _
  $region5: #{_anchor_level.1} parent=0 // pred_fallthru
    _
  // Predicated region
  $region6: #{_anchor_level.1} parent=0 // pred_check
    _
  $region7: #{_anchor_level.1} parent=0 // pred_check_branch
    %14 = sbr.rel (0) target = $region9
  $region8: #{_anchor_level.1} parent=0 // pred_region
    _
  $region9: #{_anchor_level.1} parent=0 // pred_fallthru
    _
  // Predicated region
  $region10: #{_anchor_level.1} parent=0 // pred_check
    _
  $region11: #{_anchor_level.1} parent=0 // pred_check_branch
    %16 = sbr.rel (0) target = $region13
  $region12: #{_anchor_level.1} parent=0 // pred_region
    _
  $region13: #{_anchor_level.1} parent=0 // pred_fallthru
    _
  // Predicated region
  $region14: #{_anchor_level.1} parent=0 // pred_check
    _
  $region15: #{_anchor_level.1} parent=0 // pred_check_branch
    %18 = sbr.rel (0) target = $region17
  $region16: #{_anchor_level.1} parent=0 // pred_region
    _
  $region17: #{_anchor_level.1} parent=0 // pred_fallthru
    _
  %s21 = smul.u32 0, 256
  %v22 = vlaneseq
  %v23 = vand.u32 %v22, 127
  %v24 = vadd.s32 %v23, 128
  %v25 = vstv %s21
  %v26 = vadd.s32 %v25, %v23
  %v27 = vadd.s32 %v25, %v24
  %v28 = vcvt.s32.f32 %v26
  %v29 = vcvt.s32.f32 %v27
  %v30 = vrcp.pop 16.0
  %v31 = vmul.f32 %v28, %v30
  %v32 = vmul.f32 %v29, %v30
  %v33 = vcvt.f32.s32.to.zero.pseudo %v31
  %v34 = vcvt.f32.s32.to.zero.pseudo %v32
  %v35 = vmul.u32 %v33, 16
  %v36 = vmul.u32 %v34, 16
  %v37 = vsub.s32 %v26, %v35
  %v38 = vsub.s32 %v27, %v36
  %vm39 = vcmp.lt.s32.totalorder %v37, 0
  %vm40 = vcmp.lt.s32.totalorder %v38, 0
  %v41 = vsel %vm39, 1, 0
  %v42 = vsel %vm40, 1, 0
  %v43 = vsub.s32 %v33, %v41
  %v44 = vsub.s32 %v34, %v42
  %vm45 = vcmp.ge.s32.totalorder %v37, 16
  %vm46 = vcmp.ge.s32.totalorder %v38, 16
  %v47 = vsel %vm45, 1, 0
  %v48 = vsel %vm46, 1, 0
  %v49 = vadd.s32 %v43, %v47
  %v50 = vadd.s32 %v44, %v48
  %v51 = vmul.u32 %v49, 16
  %v52 = vmul.u32 %v50, 16
  %v53 = vsub.s32 %v26, %v51
  %v54 = vsub.s32 %v27, %v52
  %v55 = vcvt.s32.f32 %v53
  %v56 = vcvt.s32.f32 %v54
  %v57 = vmul.f32 %v55, 8.0
  %v58 = vmul.f32 %v56, 8.0
  %v59 = vcvt.s32.f32 %v49
  %v60 = vcvt.s32.f32 %v50
  %v61 = vmul.f32 %v59, 8.0
  %v62 = vmul.f32 %v60, 8.0
  %v63 = vld [vmem:[%s1] sm:$0xff]
  %v64 = vld [vmem:[%s1 + $0x8] sm:$0xf]
  %vm65 = vcmp.gt.f32.partialorder %v63, 0.5
  %vm66 = vcmp.gt.f32.partialorder %v64, 0.5
  %v67 = vsel %vm65, 1, 0
  %v68 = vsel %vm66, 1, 0
  %69 = vset.pattern.permute.xlu0 0
  %70 = vperm.xlu0 %69, %v67
  %v71 = vpop.permute.xlu0 %70
  %72 = vset.pattern.permute.xlu0 0
  %73 = vperm.xlu0 %72, %v68
  %v74 = vpop.permute.xlu0 %73
  %vm75 = vcmp.eq.s32.totalorder %v71, 1
  %vm76 = vcmp.eq.s32.totalorder %v74, 1
  %v77 = vsel %vm75, %v57, %v61
  %v78 = vsel %vm75, %v58, %v62
  %v79 = vsel %vm76, %v57, %v61
  %v80 = vsel %vm76, %v58, %v62
  %v81 = vld [vmem:[%s0] sm:$0xff]
  %v82 = vld [vmem:[%s0 + $0x8] sm:$0xf]
  %84 = vset.pattern.permute.xlu0 0
  %85 = vperm.xlu0 %84, %v81
  %v86 = vpop.permute.xlu0 %85
  %89 = vset.pattern.permute.xlu0 0
  %90 = vperm.xlu0 %89, %v82
  %v91 = vpop.permute.xlu0 %90
  %v93 = vadd.f32 %v86, %v77
  %v94 = vadd.f32 %v86, %v78
  %v95 = vadd.f32 %v91, %v79
  %v96 = vadd.f32 %v91, %v80
  %97 = vst [vmem:[%s4] sm:$0xff] %v93
  %98 = vst [vmem:[%s4 + $0x8] sm:$0xff] %v94
  %99 = vst [vmem:[%s4 + $0x10] sm:$0xf] %v95
  %100 = vst [vmem:[%s4 + $0x18] sm:$0xf] %v96
  %v103 = vrot.slane %v93, 5
  %v104 = vrot.slane %v94, 5
  %vm107 = vcmask 1042432
  %v108 = vsel %vm107, %v93, %v103
  %v109 = vsel %vm107, %v94, %v104
  %v110 = vrot.slane %v93, 3
  %v111 = vrot.slane %v94, 3
  %v114 = vsel %vm107, %v110, %v93
  %v115 = vsel %vm107, %v111, %v94
  %vm118 = vcmask 1041408
  %v119 = vrot.slane %v93, 6
  %v120 = vrot.slane %v95, 6
  %v121 = vsel %vm118, %v119, %v120
  %v122 = vrot.slane %v94, 6
  %v123 = vrot.slane %v96, 6
  %v124 = vsel %vm118, %v122, %v123
  %vm127 = vcmask 1044480
  %v128 = vrot.slane %v95, 3
  %v129 = vsel %vm127, %v110, %v128
  %v130 = vrot.slane %v96, 3
  %v131 = vsel %vm127, %v111, %v130
  %v134 = vsel %vm107, %v121, %v129
  %v135 = vsel %vm107, %v124, %v131
  %v136 = vrot.slane %v95, 1
  %v137 = vrot.slane %v96, 1
  %v142 = vsel %vm107, %v136, %v120
  %v143 = vsel %vm107, %v137, %v123
  %vm144 = vcmp.ge.f32.partialorder %v108, 0.0
  %vm145 = vcmp.ge.f32.partialorder %v109, 0.0
  %vm146 = vcmp.ge.f32.partialorder %v114, 0.0
  %vm147 = vcmp.ge.f32.partialorder %v115, 0.0
  %vm148 = vmand %vm144, %vm146
  %vm149 = vmand %vm145, %vm147
  %v150 = vld [vmem:[%s2] sm:$0x3f]
  %152 = vset.pattern.permute.xlu0 0
  %153 = vperm.xlu0 %152, %v150
  %v154 = vpop.permute.xlu0 %153
  %vm156 = vcmp.lt.f32.partialorder %v134, %v154
  %vm157 = vcmp.lt.f32.partialorder %v135, %v154
  %vm158 = vmand %vm148, %vm156
  %vm159 = vmand %vm149, %vm157
  %v160 = vld [vmem:[%s3] sm:$0x3f]
  %162 = vset.pattern.permute.xlu0 0
  %163 = vperm.xlu0 %162, %v160
  %v164 = vpop.permute.xlu0 %163
  %vm166 = vcmp.lt.f32.partialorder %v142, %v164
  %vm167 = vcmp.lt.f32.partialorder %v143, %v164
  %vm168 = vmand %vm158, %vm166
  %vm169 = vmand %vm159, %vm167
  %vm170 = vmpackc.low %vm168, %vm168
  %vm171 = vmpackc.even %vm170, %vm170
  %vm172 = vmpackc.low %vm169, %vm169
  %vm173 = vmpackc.even %vm172, %vm172
  %v174 = vsel %vm171, 16843009, 0
  %v175 = vsel %vm173, 16843009, 0
  %v176 = vunpack.c.0.s8 %v174
  %v177 = vunpack.c.0.s8 %v175
  %v178 = vpack.c.b16 %v177, %v176
  %v179 = vpack.c.b8 %v178, %v178
  %vm180 = vcmask 1041408
  %vm181 = vsmask.f32 1280
  %vm182 = vmand %vm180, %vm181
  %vm183 = vcmask 1043458
  %vm184 = vsmask.f32 3328
  %vm185 = vmand %vm183, %vm184
  %vm186 = vmor %vm185, %vm182
  %v187 = vld [vmem:[%s5] sm:$0xf]
  %v188 = vsel %vm186, %v179, %v187
  %189 = vst [vmem:[%s5] sm:$0xf] %v188
  // Predicated region
  $region18: #{_anchor_level.1} parent=0 // pred_check
    _
  $region19: #{_anchor_level.1} parent=0 // pred_check_branch
    %191 = sbr.rel (0) target = $region21
  $region20: #{_anchor_level.1} parent=0 // pred_region
    _
  $region21: #{_anchor_level.1} parent=0 // pred_fallthru
    _
  // Predicated region
  $region22: #{_anchor_level.1} parent=0 // pred_check
    _
  $region23: #{_anchor_level.1} parent=0 // pred_check_branch
    %193 = sbr.rel (0) target = $region25
  $region24: #{_anchor_level.1} parent=0 // pred_region
    _
  $region25: #{_anchor_level.1} parent=0 // pred_fallthru
    _
  // Predicated region
  $region26: #{_anchor_level.1} parent=0 // pred_check
    _
  $region27: #{_anchor_level.1} parent=0 // pred_check_branch
    %195 = sbr.rel (0) target = $region29
  $region28: #{_anchor_level.1} parent=0 // pred_region
    _
  $region29: #{_anchor_level.1} parent=0 // pred_fallthru
    _
  // Predicated region
  $region30: #{_anchor_level.1} parent=0 // pred_check
    _
  $region31: #{_anchor_level.1} parent=0 // pred_check_branch
    %197 = sbr.rel (0) target = $region33
  $region32: #{_anchor_level.1} parent=0 // pred_region
    _
  $region33: #{_anchor_level.1} parent=0 // pred_fallthru
    _

</llo_original>
